<compile_context>
chip_gen: v7x
topology: tpu7x:2x2x1
jax: 0.10.0
libtpu: 0.0.40
codegen_flags: <defaults>
</compile_context>

<pallas_src>
import functools

import jax
import jax.numpy as jnp
from jax.experimental import pallas as pl
from jax.experimental.pallas import tpu as pltpu


def _round_up(x: int, m: int) -> int:
    return (x + m - 1) // m * m


def _gram_l1_kernel(x_ref, y_ref, o_ref, acc_ref, *, inv_scale):
    # x_ref, y_ref: (1, C, TK) VMEM chunks of one batch element.
    # o_ref:  (1, 8, 128) lane-dense per-batch output block (written once).
    # acc_ref: (C, C) f32 scratch, resident across the W-chunk grid axis.
    k = pl.program_id(1)

    @pl.when(k == 0)
    def _():
        acc_ref[...] = jnp.zeros_like(acc_ref)

    x = x_ref[0]  # (C, TK)
    y = y_ref[0]  # (C, TK)

    # Contract over the last dim of both operands -> (C, C). No explicit x.T
    # (avoids an XLU transpose pass); MXU accumulates in f32.
    dn = (((1,), (1,)), ((), ()))
    gx = jax.lax.dot_general(x, x, dimension_numbers=dn,
                             preferred_element_type=jnp.float32)
    gy = jax.lax.dot_general(y, y, dimension_numbers=dn,
                             preferred_element_type=jnp.float32)
    # Accumulate the difference Gram directly (one accumulator instead of two).
    acc_ref[...] += gx - gy

    @pl.when(k == pl.num_programs(1) - 1)
    def _():
        # |s*A - s*B| = s*|A - B|: abs/sum and the scale happen once per batch.
        val = jnp.sum(jnp.abs(acc_ref[...])) * inv_scale
        o_ref[...] = jnp.broadcast_to(val, o_ref.shape).astype(o_ref.dtype)


def gram_l1_loss(output: jax.Array, target: jax.Array, *, tk: int = 512) -> jax.Array:
    """Pallas equivalent of Gram.forward: sum |Gram(output) - Gram(target)|."""
    # Flatten trailing spatial dims: (B, C, H, W, ...) -> (B, C, prod(spatial))
    if output.ndim > 3:
        output = output.reshape(output.shape[0], output.shape[1], -1)
    if target.ndim > 3:
        target = target.reshape(target.shape[0], target.shape[1], -1)
    assert output.shape == target.shape, (output.shape, target.shape)

    # Keep inputs in their native dtype (bf16 stays bf16 -> half the HBM
    # traffic); the Gram accumulation is always done in f32 on the MXU.
    dtype = jnp.promote_types(output.dtype, target.dtype)
    output = output.astype(dtype)
    target = target.astype(dtype)

    B, C, W = output.shape
    inv_scale = 1.0 / float(C * W)  # normalize by the *unpadded* C*W

    # W-chunk size: lane-dense multiple of 128, capped at `tk` (sweet spot
    # 512-2048); keeps VMEM at O(C*TK) per buffer regardless of W so the
    # pipeline fits the scoped VMEM limit on v5e/v6e/v7x.
    tk_eff = _round_up(min(int(tk), _round_up(W, 128)), 128)
    w_pad = _round_up(W, tk_eff)
    if w_pad != W:
        pad = ((0, 0), (0, 0), (0, w_pad - W))
        output = jnp.pad(output, pad)  # zero columns contribute 0 to the Gram
        target = jnp.pad(target, pad)
    num_k = w_pad // tk_eff

    kernel = functools.partial(_gram_l1_kernel, inv_scale=inv_scale)

    out = pl.pallas_call(
        kernel,
        out_shape=jax.ShapeDtypeStruct((B, 8, 128), jnp.float32),
        grid_spec=pltpu.PrefetchScalarGridSpec(
            num_scalar_prefetch=0,
            grid=(B, num_k),
            in_specs=[
                pl.BlockSpec((1, C, tk_eff), lambda b, k: (b, 0, k)),
                pl.BlockSpec((1, C, tk_eff), lambda b, k: (b, 0, k)),
            ],
            # Per-batch lane-dense output block so the batch axis can be
            # 'parallel' (shards across the two TensorCores on v7x).
            out_specs=pl.BlockSpec((1, 8, 128), lambda b, k: (b, 0, 0)),
            scratch_shapes=[pltpu.VMEM((C, C), jnp.float32)],
        ),
        compiler_params=pltpu.CompilerParams(
            dimension_semantics=("parallel", "arbitrary"),
        ),
    )(output, target)

    # Reduce the per-batch partial sums to the final scalar loss.
    return jnp.sum(out[:, 0, 0])


if __name__ == "__main__":
    key = jax.random.PRNGKey(0)
    k1, k2, k3, k4 = jax.random.split(key, 4)

    # Case 1: small NCHW inputs consistent with the module's forward.
    x = jax.random.normal(k1, (2, 4, 16, 16), dtype=jnp.float32)
    y = jax.random.normal(k2, (2, 4, 16, 16), dtype=jnp.float32)
    loss = gram_l1_loss(x, y)
    jax.block_until_ready(loss)

    xf = x.reshape(2, 4, -1)
    yf = y.reshape(2, 4, -1)
    gx = jnp.einsum("bcw,bdw->bcd", xf, xf) / (4 * 256)
    gy = jnp.einsum("bcw,bdw->bcd", yf, yf) / (4 * 256)
    ref = jnp.sum(jnp.abs(gx - gy))
    assert jnp.allclose(loss, ref, rtol=1e-5, atol=1e-5), (loss, ref)

    # Case 2: W not a multiple of the chunk size -> exercises zero-padding of
    # the remainder chunk and multi-chunk accumulation (num_k > 1).
    x2 = jax.random.normal(k3, (2, 8, 20, 20), dtype=jnp.float32)
    y2 = jax.random.normal(k4, (2, 8, 20, 20), dtype=jnp.float32)
    loss2 = gram_l1_loss(x2, y2, tk=128)
    jax.block_until_ready(loss2)

    xf2 = x2.reshape(2, 8, -1)
    yf2 = y2.reshape(2, 8, -1)
    gx2 = jnp.einsum("bcw,bdw->bcd", xf2, xf2) / (8 * 400)
    gy2 = jnp.einsum("bcw,bdw->bcd", yf2, yf2) / (8 * 400)
    ref2 = jnp.sum(jnp.abs(gx2 - gy2))
    assert jnp.allclose(loss2, ref2, rtol=1e-5, atol=1e-5), (loss2, ref2)

    print("KERNEL_OK")
</pallas_src>

<mosaic_0001>
module attributes {stable_mosaic.version = 11 : i64} {
  func.func @_gram_l1_kernel(%arg0: i32, %arg1: i32, %arg2: memref<1x4x256xf32, #tpu.memory_space<vmem>>, %arg3: memref<1x4x256xf32, #tpu.memory_space<vmem>>, %arg4: memref<1x8x128xf32, #tpu.memory_space<vmem>>, %arg5: memref<4x4xf32, #tpu.memory_space<vmem>>) attributes {dimension_semantics = [#tpu.dimension_semantics<parallel>, #tpu.dimension_semantics<arbitrary>], iteration_bounds = array<i64: 2, 1>, scalar_prefetch = 0 : i64, scratch_operands = 1 : i64, tpu.core_type = #tpu.core_type<tc>, window_params = [{transform_indices = @transform_0, window_bounds = array<i64: 1, 4, 256>}, {transform_indices = @transform_1, window_bounds = array<i64: 1, 4, 256>}, {transform_indices = @transform_2, window_bounds = array<i64: 1, 8, 128>}]} {
    %c0_i32 = arith.constant 0 : i32
    %0 = arith.cmpi eq, %arg1, %c0_i32 : i32
    %1 = arith.extui %0 : i1 to i32
    %c0_i32_0 = arith.constant 0 : i32
    %2 = arith.cmpi ne, %1, %c0_i32_0 : i32
    scf.if %2 {
      %cst_13 = arith.constant 0.000000e+00 : f32
      %16 = vector.broadcast %cst_13 : f32 to vector<4x4xf32>
      %c0_14 = arith.constant 0 : index
      %c0_15 = arith.constant 0 : index
      %17 = vector.load %arg5[%c0_14, %c0_15] : memref<4x4xf32, #tpu.memory_space<vmem>>, vector<4x4xf32>
      tpu.vector_store %arg5[%c0_14, %c0_15], %16 {strides = array<i32>} : memref<4x4xf32, #tpu.memory_space<vmem>>, vector<4x4xf32>,
    } else {
    }
    %c0 = arith.constant 0 : index
    %c0_1 = arith.constant 0 : index
    %c0_2 = arith.constant 0 : index
    %3 = vector.load %arg2[%c0, %c0_1, %c0_2] : memref<1x4x256xf32, #tpu.memory_space<vmem>>, vector<1x4x256xf32>
    %4 = vector.shape_cast %3 : vector<1x4x256xf32> to vector<4x256xf32>
    %c0_3 = arith.constant 0 : index
    %c0_4 = arith.constant 0 : index
    %c0_5 = arith.constant 0 : index
    %5 = vector.load %arg3[%c0_3, %c0_4, %c0_5] : memref<1x4x256xf32, #tpu.memory_space<vmem>>, vector<1x4x256xf32>
    %6 = vector.shape_cast %5 : vector<1x4x256xf32> to vector<4x256xf32>
    %cst = arith.constant dense<0.000000e+00> : vector<4x4xf32>
    %7 = tpu.matmul %4, %4, %cst {dimension_numbers = #tpu.dot_dimension_numbers<[1], [1], [0], [0], [0, 0, 1, 0], [], []>} : vector<4x256xf32>, vector<4x256xf32>, vector<4x4xf32> -> vector<4x4xf32>
    %cst_6 = arith.constant dense<0.000000e+00> : vector<4x4xf32>
    %8 = tpu.matmul %6, %6, %cst_6 {dimension_numbers = #tpu.dot_dimension_numbers<[1], [1], [0], [0], [0, 0, 1, 0], [], []>} : vector<4x256xf32>, vector<4x256xf32>, vector<4x4xf32> -> vector<4x4xf32>
    %c0_7 = arith.constant 0 : index
    %c0_8 = arith.constant 0 : index
    %9 = vector.load %arg5[%c0_7, %c0_8] : memref<4x4xf32, #tpu.memory_space<vmem>>, vector<4x4xf32>
    %10 = arith.subf %7, %8 : vector<4x4xf32>
    %11 = arith.addf %9, %10 : vector<4x4xf32>
    %c0_9 = arith.constant 0 : index
    %c0_10 = arith.constant 0 : index
    %12 = vector.load %arg5[%c0_9, %c0_10] : memref<4x4xf32, #tpu.memory_space<vmem>>, vector<4x4xf32>
    tpu.vector_store %arg5[%c0_9, %c0_10], %11 {strides = array<i32>} : memref<4x4xf32, #tpu.memory_space<vmem>>, vector<4x4xf32>,
    %c0_i32_11 = arith.constant 0 : i32
    %13 = arith.cmpi eq, %arg1, %c0_i32_11 : i32
    %14 = arith.extui %13 : i1 to i32
    %c0_i32_12 = arith.constant 0 : i32
    %15 = arith.cmpi ne, %14, %c0_i32_12 : i32
    scf.if %15 {
      %c0_13 = arith.constant 0 : index
      %c0_14 = arith.constant 0 : index
      %16 = vector.load %arg5[%c0_13, %c0_14] : memref<4x4xf32, #tpu.memory_space<vmem>>, vector<4x4xf32>
      %17 = math.absf %16 : vector<4x4xf32>
      %18 = vector.shape_cast %17 : vector<4x4xf32> to vector<1x4x4xf32>
      %cst_15 = arith.constant dense<0.000000e+00> : vector<1xf32>
      %19 = vector.multi_reduction <add>, %18, %cst_15 [1, 2] : vector<1x4x4xf32> to vector<1xf32>
      %20 = vector.shape_cast %19 : vector<1xf32> to vector<1x1x1xf32>
      %21 = vector.extract %20[0, 0, 0] : f32 from vector<1x1x1xf32>
      %cst_16 = arith.constant 9.765625E-4 : f32
      %22 = arith.mulf %21, %cst_16 : f32
      %23 = vector.broadcast %22 : f32 to vector<1x8x128xf32>
      %c0_17 = arith.constant 0 : index
      %c0_18 = arith.constant 0 : index
      %c0_19 = arith.constant 0 : index
      %24 = vector.load %arg4[%c0_17, %c0_18, %c0_19] : memref<1x8x128xf32, #tpu.memory_space<vmem>>, vector<1x8x128xf32>
      tpu.vector_store %arg4[%c0_17, %c0_18, %c0_19], %23 {strides = array<i32>} : memref<1x8x128xf32, #tpu.memory_space<vmem>>, vector<1x8x128xf32>,
    } else {
    }
    return
  }
  func.func @transform_0(%arg0: i32, %arg1: i32) -> (i32, i32, i32) {
    %c0_i32 = arith.constant 0 : i32
    %c0_i32_0 = arith.constant 0 : i32
    return %arg0, %c0_i32, %arg1 : i32, i32, i32
  }
  func.func @transform_1(%arg0: i32, %arg1: i32) -> (i32, i32, i32) {
    %c0_i32 = arith.constant 0 : i32
    %c0_i32_0 = arith.constant 0 : i32
    return %arg0, %c0_i32, %arg1 : i32, i32, i32
  }
  func.func @transform_2(%arg0: i32, %arg1: i32) -> (i32, i32, i32) {
    %c0_i32 = arith.constant 0 : i32
    %c0_i32_0 = arith.constant 0 : i32
    %c0_i32_1 = arith.constant 0 : i32
    return %arg0, %c0_i32, %c0_i32_0 : i32, i32, i32
  }
}

</mosaic_0001>

<llo_original>
// kernel: tpu_custom_call.1
$region0: #{tpu_custom_call.1}
  #allocation0 [shape = 'u32[]', space=smem, size = 0x4, offset = 0x4, fixed_abs, tag = 'smem constant byte address 0x4 - core index']
  #allocation1 [shape = 'u32[144,128]{1,0:T(1,128)}', space=vmem, size = 0x12000, scoped, tag = 'internal scratch']
  #allocation2 [shape = 'f32[4,4]{1,0:T(4,128)}', space=vmem, size = 0x800, scoped, tag = 'scratch operand']
  %s0 = inlined_call_operand.hbm [shape: f32[2,4,256], index: 0, kind: input, shape index: {}]
  %s1 = inlined_call_operand.hbm [shape: f32[2,4,256], index: 1, kind: input, shape index: {}]
  %s2 = inlined_call_operand.hbm [shape: f32[2,8,128], index: 2, kind: output, shape index: {}]
  %s3 = sld [smem:[#allocation0]]
  $region57: #{tpu_custom_call.1} parent=0
    _
  %s5 = ssub.s32 1, %s3
  %s6 = scalar_select 0, %s5, %s3
  $region1: #{tpu_custom_call.1} parent=0
    #allocation3 [shape = 'u8[8192]{0}', space=vmem, size = 0x2000, scoped, tag = 'input window, operand 0']
    #allocation4 [shape = 's32[2]{0}', space=sflag, size = 0x8, scoped, tag = 'scoped memory for tpu_custom_call.1']
    #allocation5 [shape = 's32[2]{0}', space=sflag, size = 0x8, scoped, tag = 'scoped memory for tpu_custom_call.1']
    #allocation6 [shape = 'u8[8192]{0}', space=vmem, size = 0x2000, scoped, tag = 'input window, operand 1']
    #allocation7 [shape = 's32[2]{0}', space=sflag, size = 0x8, scoped, tag = 'scoped memory for tpu_custom_call.1']
    #allocation8 [shape = 'u8[8192]{0}', space=vmem, size = 0x2000, scoped, tag = 'output window, operand 0']
    %7 = vsyncpa [#allocation4], 0
    %s8 = scalar_lea.sflag [#allocation4], 1
    %9 = vsyncpa %s8, 0
    %10 = vsyncpa [#allocation7], 0
    %s11 = scalar_lea.sflag [#allocation7], 1
    %12 = vsyncpa %s11, 0
    %13 = vsyncpa [#allocation5], 0
    %s14 = scalar_lea.sflag [#allocation5], 1
    %15 = vsyncpa %s14, 0
    loop: start=0, step=1, limit=4
    $region2: #{tpu_custom_call.1} parent=1 // loop_pre_header
      _
    $region3: #{tpu_custom_call.1} parent=1 // loop_header
      %s17 = sphi 0, %s21
      %p18 = scmp.ge.s32.totalorder %s17, 4
      %s24 = sphi 0, %s36
      %s25 = sphi 0, %s32
      %s26 = sphi 0, %s24
      %s27 = sphi 0, %s25
      %s28 = sphi 0, %s26
      %s29 = sphi 0, %s27
      %s41 = sphi 0, %s43
      %s44 = sphi 0, %s41
      %s45 = sphi 0, %s44
      %s61 = sphi 0, %s45
      %s69 = sphi 0, %s71
      %s72 = sphi 0, %s69
      %s73 = sphi 0, %s72
      %s89 = sphi 0, %s73
      %s95 = sphi 0, %s97
      %s98 = sphi 0, %s95
      %s99 = sphi 0, %s98
      %s115 = sphi 0, %s99
    $region4: #{tpu_custom_call.1} parent=1 // loop_header_branch
      %20 = sbr.rel (%p18) target = $region8
    $region5: #{tpu_custom_call.1} parent=1 // loop_body
      %s22 = ssub.s32 %s17, 1
      %s23 = ssub.s32 %s17, 2
      %s30 = sadd.s32 1, %s25
      %p31 = scmp.ge.s32.totalorder %s30, 1
      %s32 = scalar_select %p31, 0, %s30
      %s33 = sadd.s32 1, %s24
      %s34 = scalar_select %p31, %s33, %s24
      %p35 = scmp.ge.s32.totalorder %s34, 2
      %s36 = scalar_select %p35, 0, %s34
      %s37 = ssub.s32 %s24, %s36
      %s38 = ssub.s32 %s25, %s32
      %s39 = sor.u32 %s37, %s38
      %p40 = scmp.eq.s32.totalorder %s39, 0
      %s42 = sadd.s32 %s41, 1
      %s43 = scalar_select %p40, %s41, %s42
      %p46 = pneg %p40
      %p47 = scmp.eq.s32.totalorder %s17, 1
      %p48 = por %p46, %p47
      %p49 = scmp.ne.s32.totalorder %s41, %s44
      %p50 = scmp.eq.s32.totalorder %s17, 0
      %p51 = por %p49, %p50
      %p52 = scmp.ne.s32.totalorder %s41, %s44
      %p53 = scmp.eq.s32.totalorder %s22, 1
      %p54 = por %p52, %p53
      %p55 = scmp.ne.s32.totalorder %s44, %s45
      %p56 = scmp.eq.s32.totalorder %s22, 0
      %p57 = por %p55, %p56
      %p58 = scmp.ne.s32.totalorder %s44, %s45
      %p59 = scmp.eq.s32.totalorder %s23, 1
      %p60 = por %p58, %p59
      %p62 = scmp.ne.s32.totalorder %s45, %s61
      %p63 = scmp.eq.s32.totalorder %s23, 0
      %p64 = por %p62, %p63
      %s65 = ssub.s32 %s24, %s36
      %s66 = ssub.s32 %s25, %s32
      %s67 = sor.u32 %s65, %s66
      %p68 = scmp.eq.s32.totalorder %s67, 0
      %s70 = sadd.s32 %s69, 1
      %s71 = scalar_select %p68, %s69, %s70
      %p74 = pneg %p68
      %p75 = scmp.eq.s32.totalorder %s17, 1
      %p76 = por %p74, %p75
      %p77 = scmp.ne.s32.totalorder %s69, %s72
      %p78 = scmp.eq.s32.totalorder %s17, 0
      %p79 = por %p77, %p78
      %p80 = scmp.ne.s32.totalorder %s69, %s72
      %p81 = scmp.eq.s32.totalorder %s22, 1
      %p82 = por %p80, %p81
      %p83 = scmp.ne.s32.totalorder %s72, %s73
      %p84 = scmp.eq.s32.totalorder %s22, 0
      %p85 = por %p83, %p84
      %p86 = scmp.ne.s32.totalorder %s72, %s73
      %p87 = scmp.eq.s32.totalorder %s23, 1
      %p88 = por %p86, %p87
      %p90 = scmp.ne.s32.totalorder %s73, %s89
      %p91 = scmp.eq.s32.totalorder %s23, 0
      %p92 = por %p90, %p91
      %s93 = ssub.s32 %s24, %s36
      %p94 = scmp.eq.s32.totalorder %s93, 0
      %s96 = sadd.s32 %s95, 1
      %s97 = scalar_select %p94, %s95, %s96
      %p100 = pneg %p94
      %p101 = scmp.eq.s32.totalorder %s17, 1
      %p102 = por %p100, %p101
      %p103 = scmp.ne.s32.totalorder %s95, %s98
      %p104 = scmp.eq.s32.totalorder %s17, 0
      %p105 = por %p103, %p104
      %p106 = scmp.ne.s32.totalorder %s95, %s98
      %p107 = scmp.eq.s32.totalorder %s22, 1
      %p108 = por %p106, %p107
      %p109 = scmp.ne.s32.totalorder %s98, %s99
      %p110 = scmp.eq.s32.totalorder %s22, 0
      %p111 = por %p109, %p110
      %p112 = scmp.ne.s32.totalorder %s98, %s99
      %p113 = scmp.eq.s32.totalorder %s23, 1
      %p114 = por %p112, %p113
      %p116 = scmp.ne.s32.totalorder %s99, %s115
      %p117 = scmp.eq.s32.totalorder %s23, 0
      %p118 = por %p116, %p117
      %p119 = scmp.le.s32.totalorder 1, %s17
      %p120 = scmp.lt.s32.totalorder %s17, 3
      %p121 = pnand %p119, %p120
      %p122 = pneg %p121
      // Predicated region
      $region9: #{tpu_custom_call.1} parent=5 // pred_check
        _
      $region10: #{tpu_custom_call.1} parent=5 // pred_check_branch
        %124 = sbr.rel (%p121) target = $region12
      $region11: #{tpu_custom_call.1} parent=5 // pred_region
        %s125 = ssub.s32 %s17, 1
      $region12: #{tpu_custom_call.1} parent=5 // pred_fallthru
        _
      %p126 = scmp.lt.s32.totalorder %s17, 2
      // Predicated region
      $region13: #{tpu_custom_call.1} parent=5 // pred_check
        %p127 = pneg %p126
      $region14: #{tpu_custom_call.1} parent=5 // pred_check_branch
        %129 = sbr.rel (%p127) target = $region16
      $region15: #{tpu_custom_call.1} parent=5 // pred_region
        // Predicated region
        $region17: #{tpu_custom_call.1} parent=15 // pred_check
          %p130 = pneg %p51
        $region18: #{tpu_custom_call.1} parent=15 // pred_check_branch
          %132 = sbr.rel (%p130) target = $region20
        $region19: #{tpu_custom_call.1} parent=15 // pred_region
          %s133 = sand.u32 %s41, 1
          %s134 = scalar_lea.sflag [#allocation4], %s133
          %s135 = sand.u32 %s41, 1
          %s136 = smul.addr %s135, 8
          %s137 = scalar_lea.vmem [#allocation3], %s136
          %s138 = smul.u32 2, %s25
          %s140 = ssub.s32 128, 128
          %141 = vsyncadd %s134, %s140
          %s142 = smul.addr %s24, 2
          %s143 = sadd.s32 %s138, %s142
          %s144 = smul.addr %s143, 64
          %s145 = scalar_lea.hbm %s0, %s144
          %s147 = sshll.u32 %s137, 4
          %s148 = int_to_ptr.vmem [resolvable:$true] %s147
          %150 = dma.hbm_to_vmem [thread:$0]  %s145, 128, %s148, %s134
        $region20: #{tpu_custom_call.1} parent=15 // pred_fallthru
          _
        // Predicated region
        $region21: #{tpu_custom_call.1} parent=15 // pred_check
          %p151 = pneg %p79
        $region22: #{tpu_custom_call.1} parent=15 // pred_check_branch
          %153 = sbr.rel (%p151) target = $region24
        $region23: #{tpu_custom_call.1} parent=15 // pred_region
          %s154 = sand.u32 %s69, 1
          %s155 = scalar_lea.sflag [#allocation7], %s154
          %s156 = sand.u32 %s69, 1
          %s157 = smul.addr %s156, 8
          %s158 = scalar_lea.vmem [#allocation6], %s157
          %s159 = smul.u32 2, %s25
          %s161 = ssub.s32 128, 128
          %162 = vsyncadd %s155, %s161
          %s163 = smul.addr %s24, 2
          %s164 = sadd.s32 %s159, %s163
          %s165 = smul.addr %s164, 64
          %s166 = scalar_lea.hbm %s1, %s165
          %s168 = sshll.u32 %s158, 4
          %s169 = int_to_ptr.vmem [resolvable:$true] %s168
          %171 = dma.hbm_to_vmem [thread:$0]  %s166, 128, %s169, %s155
        $region24: #{tpu_custom_call.1} parent=15 // pred_fallthru
          _
      $region16: #{tpu_custom_call.1} parent=5 // pred_fallthru
        _
      %p172 = scmp.le.s32.totalorder 1, %s17
      %p173 = scmp.lt.s32.totalorder %s17, 3
      %p174 = pnand %p172, %p173
      %p175 = pneg %p174
      // Predicated region
      $region25: #{tpu_custom_call.1} parent=5 // pred_check
        _
      $region26: #{tpu_custom_call.1} parent=5 // pred_check_branch
        %177 = sbr.rel (%p174) target = $region28
      $region27: #{tpu_custom_call.1} parent=5 // pred_region
        %s178 = ssub.s32 %s17, 1
        %s179 = sand.u32 %s44, 1
        %s180 = scalar_lea.sflag [#allocation4], %s179
        %s181 = sand.u32 %s44, 1
        %s182 = smul.addr %s181, 8
        %s183 = scalar_lea.vmem [#allocation3], %s182
        // Predicated region
        $region29: #{tpu_custom_call.1} parent=27 // pred_check
          %p184 = pneg %p57
        $region30: #{tpu_custom_call.1} parent=27 // pred_check_branch
          %186 = sbr.rel (%p184) target = $region32
        $region31: #{tpu_custom_call.1} parent=27 // pred_region
          %187 = dma.done %s180, 128
        $region32: #{tpu_custom_call.1} parent=27 // pred_fallthru
          _
        %s188 = sand.u32 %s72, 1
        %s189 = scalar_lea.sflag [#allocation7], %s188
        %s190 = sand.u32 %s72, 1
        %s191 = smul.addr %s190, 8
        %s192 = scalar_lea.vmem [#allocation6], %s191
        // Predicated region
        $region33: #{tpu_custom_call.1} parent=27 // pred_check
          %p193 = pneg %p85
        $region34: #{tpu_custom_call.1} parent=27 // pred_check_branch
          %195 = sbr.rel (%p193) target = $region36
        $region35: #{tpu_custom_call.1} parent=27 // pred_region
          %196 = dma.done %s189, 128
        $region36: #{tpu_custom_call.1} parent=27 // pred_fallthru
          _
        %s197 = sand.u32 %s44, 1
        %s198 = scalar_lea.sflag [#allocation4], %s197
        %s199 = sand.u32 %s44, 1
        %s200 = smul.addr %s199, 8
        %s201 = scalar_lea.vmem [#allocation3], %s200
        %p202 = pneg %p57
        %p203 = pneg %p54
        %s204 = sand.u32 %s72, 1
        %s205 = scalar_lea.sflag [#allocation7], %s204
        %s206 = sand.u32 %s72, 1
        %s207 = smul.addr %s206, 8
        %s208 = scalar_lea.vmem [#allocation6], %s207
        %p209 = pneg %p85
        %p210 = pneg %p82
        %p211 = pneg %p111
        %p212 = pneg %p108
        %s213 = sand.u32 %s98, 1
        %s214 = scalar_lea.sflag [#allocation5], %s213
        %s215 = sand.u32 %s98, 1
        %s216 = smul.addr %s215, 8
        %s217 = scalar_lea.vmem [#allocation8], %s216
        %s218 = smul.u32 2, %s27
        %s219 = smul.u32 2, %s27
        %p220 = scmp.eq.s32.totalorder %s27, 0
        // Predicated region
        $region37: #{tpu_custom_call.1} parent=27 // pred_check
          %p221 = pneg %p220
        $region38: #{tpu_custom_call.1} parent=27 // pred_check_branch
          %223 = sbr.rel (%p221) target = $region40
        $region39: #{tpu_custom_call.1} parent=27 // pred_region
          %vm224 = vcmask 27648
          %225 = vst.msk [vmem:[#allocation2] sm:$0xf] %vm224, 0.0
        $region40: #{tpu_custom_call.1} parent=27 // pred_fallthru
          _
        %v226 = vld [vmem:[%s183] sm:$0xff]
        %v227 = vld [vmem:[%s192] sm:$0xff]
        %v229 = vcombine.high %v226, %v226
        %231 = vmatprep.subr.mxu0 %v229
        %232 = vmatpush1.xpose.msra.mxu0 %v226
        %233 = vmatprep.subr.mxu0 0.0
        %234 = vmatpush1.xpose.msra.mxu0 0.0
        %235 = vmatprep.subr.mxu0 0.0
        %236 = vmatpush1.xpose.msra.mxu0 0.0
        %237 = vmatprep.subr.mxu0 0.0
        %238 = vmatpush1.xpose.msra.mxu0 0.0
        %239 = vmatprep.subr.mxu0 0.0
        %240 = vmatpush1.xpose.msra.mxu0 0.0
        %241 = vmatprep.subr.mxu0 0.0
        %242 = vmatpush1.xpose.msra.mxu0 0.0
        %243 = vmatprep.subr.mxu0 0.0
        %244 = vmatpush1.xpose.msra.mxu0 0.0
        %245 = vmatprep.subr.mxu0 0.0
        %246 = vmatpush1.xpose.msra.mxu0 0.0
        %247 = vmatprep.subr.mxu0 0.0
        %248 = vmatpush1.xpose.msra.mxu0 0.0
        %249 = vmatprep.subr.mxu0 0.0
        %250 = vmatpush1.xpose.msra.mxu0 0.0
        %251 = vmatprep.subr.mxu0 0.0
        %252 = vmatpush1.xpose.msra.mxu0 0.0
        %253 = vmatprep.subr.mxu0 0.0
        %254 = vmatpush1.xpose.msra.mxu0 0.0
        %255 = vmatprep.subr.mxu0 0.0
        %256 = vmatpush1.xpose.msra.mxu0 0.0
        %257 = vmatprep.subr.mxu0 0.0
        %258 = vmatpush1.xpose.msra.mxu0 0.0
        %259 = vmatprep.subr.mxu0 0.0
        %260 = vmatpush1.xpose.msra.mxu0 0.0
        %261 = vmatprep.subr.mxu0 0.0
        %262 = vmatpush1.xpose.msra.mxu0 0.0
        %263 = vmatprep.subr.mxu0 0.0
        %264 = vmatpush1.xpose.msra.mxu0 0.0
        %265 = vmatprep.subr.mxu0 0.0
        %266 = vmatpush1.xpose.msra.mxu0 0.0
        %267 = vmatprep.subr.mxu0 0.0
        %268 = vmatpush1.xpose.msra.mxu0 0.0
        %269 = vmatprep.subr.mxu0 0.0
        %270 = vmatpush1.xpose.msra.mxu0 0.0
        %271 = vmatprep.subr.mxu0 0.0
        %272 = vmatpush1.xpose.msra.mxu0 0.0
        %273 = vmatprep.subr.mxu0 0.0
        %274 = vmatpush1.xpose.msra.mxu0 0.0
        %275 = vmatprep.subr.mxu0 0.0
        %276 = vmatpush1.xpose.msra.mxu0 0.0
        %277 = vmatprep.subr.mxu0 0.0
        %278 = vmatpush1.xpose.msra.mxu0 0.0
        %279 = vmatprep.subr.mxu0 0.0
        %280 = vmatpush1.xpose.msra.mxu0 0.0
        %281 = vmatprep.subr.mxu0 0.0
        %282 = vmatpush1.xpose.msra.mxu0 0.0
        %283 = vmatprep.subr.mxu0 0.0
        %284 = vmatpush1.xpose.msra.mxu0 0.0
        %285 = vmatprep.subr.mxu0 0.0
        %286 = vmatpush1.xpose.msra.mxu0 0.0
        %287 = vmatprep.subr.mxu0 0.0
        %288 = vmatpush1.xpose.msra.mxu0 0.0
        %289 = vmatprep.subr.mxu0 0.0
        %290 = vmatpush1.xpose.msra.mxu0 0.0
        %291 = vmatprep.subr.mxu0 0.0
        %292 = vmatpush1.xpose.msra.mxu0 0.0
        %293 = vmatprep.subr.mxu0 0.0
        %294 = vmatpush1.xpose.msra.mxu0 0.0
        %295 = vmatprep.mubr.f32.mxu0 %v229
        %296 = vmatmul.mubr.f32.gmra.mrb[0].mxu0 %v226
        %v297 = vpop.f32.mrb[0].mxu0
        %v298 = vadd.f32 0.0, %v297
        %v299 = vpop.f32.mrb[0].mxu0
        %300 = vdwg.mxu0
        %v302 = vcombine.high %v227, %v227
        %304 = vmatprep.subr.mxu0 %v302
        %305 = vmatpush1.xpose.msra.mxu0 %v227
        %306 = vmatprep.subr.mxu0 0.0
        %307 = vmatpush1.xpose.msra.mxu0 0.0
        %308 = vmatprep.subr.mxu0 0.0
        %309 = vmatpush1.xpose.msra.mxu0 0.0
        %310 = vmatprep.subr.mxu0 0.0
        %311 = vmatpush1.xpose.msra.mxu0 0.0
        %312 = vmatprep.subr.mxu0 0.0
        %313 = vmatpush1.xpose.msra.mxu0 0.0
        %314 = vmatprep.subr.mxu0 0.0
        %315 = vmatpush1.xpose.msra.mxu0 0.0
        %316 = vmatprep.subr.mxu0 0.0
        %317 = vmatpush1.xpose.msra.mxu0 0.0
        %318 = vmatprep.subr.mxu0 0.0
        %319 = vmatpush1.xpose.msra.mxu0 0.0
        %320 = vmatprep.subr.mxu0 0.0
        %321 = vmatpush1.xpose.msra.mxu0 0.0
        %322 = vmatprep.subr.mxu0 0.0
        %323 = vmatpush1.xpose.msra.mxu0 0.0
        %324 = vmatprep.subr.mxu0 0.0
        %325 = vmatpush1.xpose.msra.mxu0 0.0
        %326 = vmatprep.subr.mxu0 0.0
        %327 = vmatpush1.xpose.msra.mxu0 0.0
        %328 = vmatprep.subr.mxu0 0.0
        %329 = vmatpush1.xpose.msra.mxu0 0.0
        %330 = vmatprep.subr.mxu0 0.0
        %331 = vmatpush1.xpose.msra.mxu0 0.0
        %332 = vmatprep.subr.mxu0 0.0
        %333 = vmatpush1.xpose.msra.mxu0 0.0
        %334 = vmatprep.subr.mxu0 0.0
        %335 = vmatpush1.xpose.msra.mxu0 0.0
        %336 = vmatprep.subr.mxu0 0.0
        %337 = vmatpush1.xpose.msra.mxu0 0.0
        %338 = vmatprep.subr.mxu0 0.0
        %339 = vmatpush1.xpose.msra.mxu0 0.0
        %340 = vmatprep.subr.mxu0 0.0
        %341 = vmatpush1.xpose.msra.mxu0 0.0
        %342 = vmatprep.subr.mxu0 0.0
        %343 = vmatpush1.xpose.msra.mxu0 0.0
        %344 = vmatprep.subr.mxu0 0.0
        %345 = vmatpush1.xpose.msra.mxu0 0.0
        %346 = vmatprep.subr.mxu0 0.0
        %347 = vmatpush1.xpose.msra.mxu0 0.0
        %348 = vmatprep.subr.mxu0 0.0
        %349 = vmatpush1.xpose.msra.mxu0 0.0
        %350 = vmatprep.subr.mxu0 0.0
        %351 = vmatpush1.xpose.msra.mxu0 0.0
        %352 = vmatprep.subr.mxu0 0.0
        %353 = vmatpush1.xpose.msra.mxu0 0.0
        %354 = vmatprep.subr.mxu0 0.0
        %355 = vmatpush1.xpose.msra.mxu0 0.0
        %356 = vmatprep.subr.mxu0 0.0
        %357 = vmatpush1.xpose.msra.mxu0 0.0
        %358 = vmatprep.subr.mxu0 0.0
        %359 = vmatpush1.xpose.msra.mxu0 0.0
        %360 = vmatprep.subr.mxu0 0.0
        %361 = vmatpush1.xpose.msra.mxu0 0.0
        %362 = vmatprep.subr.mxu0 0.0
        %363 = vmatpush1.xpose.msra.mxu0 0.0
        %364 = vmatprep.subr.mxu0 0.0
        %365 = vmatpush1.xpose.msra.mxu0 0.0
        %366 = vmatprep.subr.mxu0 0.0
        %367 = vmatpush1.xpose.msra.mxu0 0.0
        %368 = vmatprep.mubr.f32.mxu0 %v302
        %369 = vmatmul.mubr.f32.gmra.mrb[0].mxu0 %v227
        %v370 = vpop.f32.mrb[0].mxu0
        %v371 = vadd.f32 0.0, %v370
        %v372 = vpop.f32.mrb[0].mxu0
        %373 = vdwg.mxu0
        %v374 = vld [vmem:[#allocation2] sm:$0xf]
        %v375 = vsub.f32 %v298, %v371
        %v376 = vadd.f32 %v374, %v375
        %vm377 = vcmask 27648
        %378 = vst.msk [vmem:[#allocation2] sm:$0xf] %vm377, %v376
        // Predicated region
        $region41: #{tpu_custom_call.1} parent=27 // pred_check
          %p379 = pneg %p220
        $region42: #{tpu_custom_call.1} parent=27 // pred_check_branch
          %381 = sbr.rel (%p379) target = $region44
        $region43: #{tpu_custom_call.1} parent=27 // pred_region
          %v382 = vld [vmem:[#allocation2] sm:$0xf]
          %v383 = vand.u32 2147483647, %v382
          %v384 = vsel %vm377, %v383, 0.0
          %385 = vadd.xlane.f32.xlu0 %v384
          %v386 = vpop.xlane.xlu0 %385
          %v387 = vrot.slane %v386, 4
          %v388 = vadd.f32 %v386, %v387
          %v389 = vrot.slane %v388, 2
          %v390 = vadd.f32 %v388, %v389
          %v391 = vrot.slane %v390, 1
          %v392 = vadd.f32 %v390, %v391
          %s393 = vtos %v392
          %s394 = smul.f32 %s393, 0.0009765625
          %v395 = vstv %s394
          %396 = vst [vmem:[%s217] sm:$0xff] %v395
        $region44: #{tpu_custom_call.1} parent=27 // pred_fallthru
          _
        %s397 = sand.u32 %s98, 1
        %s398 = scalar_lea.sflag [#allocation5], %s397
        %s399 = sand.u32 %s98, 1
        %s400 = smul.addr %s399, 8
        %s401 = scalar_lea.vmem [#allocation8], %s400
        // Predicated region
        $region45: #{tpu_custom_call.1} parent=27 // pred_check
          %p402 = pneg %p108
        $region46: #{tpu_custom_call.1} parent=27 // pred_check_branch
          %404 = sbr.rel (%p402) target = $region48
        $region47: #{tpu_custom_call.1} parent=27 // pred_region
          %s406 = ssub.s32 128, 128
          %407 = vsyncadd %s398, %s406
          %s408 = smul.addr %s26, 128
          %s409 = scalar_lea.hbm %s2, %s408
          %s411 = sshll.u32 %s401, 4
          %s412 = int_to_ptr.vmem [resolvable:$true] %s411
          %414 = dma.vmem_to_hbm [thread:$0]  %s412, 128, %s409, %s398
        $region48: #{tpu_custom_call.1} parent=27 // pred_fallthru
          _
      $region28: #{tpu_custom_call.1} parent=5 // pred_fallthru
        _
      %p415 = scmp.le.s32.totalorder 2, %s17
      // Predicated region
      $region49: #{tpu_custom_call.1} parent=5 // pred_check
        %p416 = pneg %p415
      $region50: #{tpu_custom_call.1} parent=5 // pred_check_branch
        %418 = sbr.rel (%p416) target = $region52
      $region51: #{tpu_custom_call.1} parent=5 // pred_region
        %s419 = ssub.s32 %s17, 2
        // Predicated region
        $region53: #{tpu_custom_call.1} parent=51 // pred_check
          %p420 = pneg %p114
        $region54: #{tpu_custom_call.1} parent=51 // pred_check_branch
          %422 = sbr.rel (%p420) target = $region56
        $region55: #{tpu_custom_call.1} parent=51 // pred_region
          %s423 = sand.u32 %s99, 1
          %s424 = scalar_lea.sflag [#allocation5], %s423
          %s425 = sand.u32 %s99, 1
          %s426 = smul.addr %s425, 8
          %s427 = scalar_lea.vmem [#allocation8], %s426
          %428 = dma.done %s424, 128
        $region56: #{tpu_custom_call.1} parent=51 // pred_fallthru
          _
      $region52: #{tpu_custom_call.1} parent=5 // pred_fallthru
        _
    $region6: #{tpu_custom_call.1} parent=1 // loop_footer
      %s21 = sadd.s32 1, %s17
    $region7: #{tpu_custom_call.1} parent=1 // loop_footer_branch
      %16 = sbr.rel target = $region3
    $region8: #{tpu_custom_call.1} parent=1 // loop_exit
      _
    %429 = vsyncpa [#allocation4], 1
    %s430 = scalar_lea.sflag [#allocation4], 1
    %431 = vsyncpa %s430, 1
    %432 = vsyncpa [#allocation7], 1
    %s433 = scalar_lea.sflag [#allocation7], 1
    %434 = vsyncpa %s433, 1
    %435 = vsyncpa [#allocation5], 1
    %s436 = scalar_lea.sflag [#allocation5], 1
    %437 = vsyncpa %s436, 1

</llo_original>
